<compile_context>
chip_gen: v7x
topology: tpu7x:2x2x1
jax: 0.10.0
libtpu: 0.0.40
codegen_flags: <defaults>
</compile_context>

<pallas_src>
import jax
import jax.numpy as jnp
from jax.experimental import pallas as pl
from jax.experimental.pallas import tpu as pltpu

KH = KW = 4
STRIDE = 2
PAD = 1


def _make_kernel(TOH, OW, C, OC):
    def kernel(xm_ref, xh_ref, w_ref, b_ref, o_ref):
        # xm_ref: (TOH, 2, WP2, 2C) bf16  main band: h-pairs [rb*TOH, rb*TOH+TOH)
        # xh_ref: (1,   2, WP2, 2C) bf16  halo: h-pair rb*TOH + TOH
        # w_ref : (KH*KW*C, OC)     bf16  weights in (kh, kw, c) K-order
        # b_ref : (1, OC)           f32
        # o_ref : (TOH*OW, OC)      f32
        taps = []
        for kh in range(KH):
            hp, hf = divmod(kh, 2)      # h-pair offset / phase inside the pair
            for p in range(2):          # column-pair offset: covers kw = 2p, 2p+1
                if hp == 0:
                    t = xm_ref[:, hf, pl.ds(p, OW), :]                    # (TOH, OW, 2C)
                else:
                    halo = xh_ref[pl.ds(0, 1), hf, pl.ds(p, OW), :]       # (1, OW, 2C)
                    if TOH > 1:
                        main = xm_ref[pl.ds(1, TOH - 1), hf, pl.ds(p, OW), :]
                        t = jnp.concatenate([main, halo], axis=0)         # (TOH, OW, 2C)
                    else:
                        t = halo
                taps.append(t)
        # K-order of the concatenation is (kh, kw, c): tap (kh, p) holds
        # [kw=2p channels..., kw=2p+1 channels...] in its 2C lanes.
        patch = jnp.concatenate(taps, axis=-1)                # (TOH, OW, KH*KW*C) bf16
        patch2d = patch.reshape(TOH * OW, KH * KW * C)
        acc = jnp.dot(patch2d, w_ref[...],
                      preferred_element_type=jnp.float32)     # (TOH*OW, OC) f32
        o_ref[...] = (acc + b_ref[...]).astype(o_ref.dtype)   # single bias broadcast

    return kernel


def _pick_toh(N, OH, OW, WP2, C, OC):
    # Per-output-row VMEM cost (bytes): double-buffered input band + output
    # block, plus the in-kernel patch / accumulator values.
    per_row = (2 * (2 * WP2 * 2 * C * 2)          # main band rows, bf16, x2 buffers
               + 2 * (OW * OC * 4)                # output rows, f32, x2 buffers
               + OW * KH * KW * C * 2             # patch value (bf16)
               + OW * OC * 4)                     # accumulator value (f32)
    fixed = (2 * (2 * WP2 * 2 * C * 2)            # halo, x2 buffers
             + 2 * (KH * KW * C * OC * 2)         # weights
             + 2 * (OC * 4)                       # bias
             + (2 << 20))                         # slack
    budget = 16 << 20                             # safe inside v7x's 32 MiB scoped default
    cap = max(1, min(128, (budget - fixed) // max(per_row, 1)))

    divs = [d for d in range(1, OH + 1) if OH % d == 0]
    # keep the output block (TOH*OW, OC) legal: second-minor must be a multiple
    # of 8 unless the block spans the full array dim.
    good = [d for d in divs if d <= cap and ((d * OW) % 8 == 0 or d == OH)]
    toh = max(good) if good else OH
    # TODO(synk): huge OH with sublane-unaligned OW falls back to a full-height
    # band, which may exceed the VMEM budget above.

    # v7x has 2 TensorCores: keep >= 2 parallel grid units when possible.
    if N * (OH // toh) < 2:
        smaller = [d for d in divs if d < toh and (d * OW) % 8 == 0]
        if smaller:
            toh = max(smaller)
    return toh


@jax.jit
def downsampler_forward(x, weight, bias):
    """
    x:      (N, C, H, W)   float32  (NCHW, matching PyTorch)
    weight: (OC, C, 4, 4)  float32  (PyTorch Conv2d layout)
    bias:   (OC,)          float32
    returns (N, OC, H//2, W//2) float32
    """
    N, C, H, W = x.shape
    OC = weight.shape[0]
    OH = (H + 2 * PAD - KH) // STRIDE + 1
    OW = (W + 2 * PAD - KW) // STRIDE + 1

    WPp = W + 2 * PAD
    WPp += WPp % 2
    WP2 = WPp // 2                       # WP2 >= OW + 1
    HPp = max(H + 2 * PAD, 2 * OH + 2)   # last band's halo (h-pair OH) must exist
    HPp += HPp % 2
    HP2 = HPp // 2                       # HP2 >= OH + 1

    TOH = _pick_toh(N, OH, OW, WP2, C, OC)

    # ---- input: NCHW f32 -> padded NHWC bf16, viewed as (N, HP2, 2, WP2, 2C).
    # The (HPp, WPp*C) -> (HP2, 2, WP2, 2C) split is a pure reshape (no HBM
    # reshuffle pass); only one transpose+pad+cast pass touches the input.
    x_nhwc = jnp.transpose(x, (0, 2, 3, 1))
    x_pad = jnp.pad(
        x_nhwc,
        ((0, 0), (PAD, HPp - H - PAD), (PAD, WPp - W - PAD), (0, 0)),
    ).astype(jnp.bfloat16)
    x_view = x_pad.reshape(N, HP2, 2, WP2, 2 * C)

    # ---- weight (OC, C, KH, KW) -> (KH*KW*C, OC) bf16, K in (kh, kw, c) order
    w2d = (jnp.transpose(weight, (2, 3, 1, 0))
           .reshape(KH * KW * C, OC).astype(jnp.bfloat16))
    b2d = bias.reshape(1, OC).astype(jnp.float32)

    kernel = _make_kernel(TOH, OW, C, OC)

    vmem_est = (2 * (TOH * 2 * WP2 * 2 * C * 2)    # main band x2
                + 2 * (2 * WP2 * 2 * C * 2)        # halo x2
                + 2 * (KH * KW * C * OC * 2)       # weights x2
                + 2 * (TOH * OW * OC * 4)          # output x2
                + TOH * OW * KH * KW * C * 2       # patch value
                + TOH * OW * OC * 4)               # accumulator value
    vmem_limit = int(min(max(2 * vmem_est, 32 << 20), 48 << 20))

    flops = 2 * N * OH * OW * KH * KW * C * OC
    bytes_accessed = (x_view.size * 2 + w2d.size * 2 + b2d.size * 4
                      + N * OH * OW * OC * 4)

    out_flat = pl.pallas_call(
        kernel,
        out_shape=jax.ShapeDtypeStruct((N, OH * OW, OC), jnp.float32),
        grid=(N, OH // TOH),
        in_specs=[
            # main band: TOH h-pairs for this output-row block
            pl.BlockSpec((None, TOH, 2, WP2, 2 * C),
                         lambda n, rb: (n, rb, 0, 0, 0)),
            # 1 h-pair halo = first pair of the next band
            pl.BlockSpec((None, 1, 2, WP2, 2 * C),
                         lambda n, rb: (n, TOH * (rb + 1), 0, 0, 0)),
            pl.BlockSpec((KH * KW * C, OC), lambda n, rb: (0, 0)),
            pl.BlockSpec((1, OC), lambda n, rb: (0, 0)),
        ],
        out_specs=pl.BlockSpec((None, TOH * OW, OC), lambda n, rb: (n, rb, 0)),
        compiler_params=pltpu.CompilerParams(
            dimension_semantics=("parallel", "parallel"),
            vmem_limit_bytes=vmem_limit),
        cost_estimate=pl.CostEstimate(flops=flops, transcendentals=0,
                                      bytes_accessed=bytes_accessed),
    )(x_view, x_view, w2d, b2d)

    # un-flatten; output was written unpadded so this transpose is cheap.
    return out_flat.reshape(N, OH, OW, OC).transpose(0, 3, 1, 2)


if __name__ == "__main__":
    key = jax.random.PRNGKey(0)
    k_x, k_w, k_b = jax.random.split(key, 3)

    N, IC, H, W = 2, 4, 16, 16
    OC = 8

    x = jax.random.normal(k_x, (N, IC, H, W), dtype=jnp.float32)
    fan_in = IC * KH * KW
    bound = 1.0 / (fan_in ** 0.5)
    weight = jax.random.uniform(k_w, (OC, IC, KH, KW), jnp.float32, -bound, bound)
    bias = jax.random.uniform(k_b, (OC,), jnp.float32, -bound, bound)

    out = downsampler_forward(x, weight, bias)
    out = jax.block_until_ready(out)

    # reference: same bf16-rounded inputs, full-precision f32 conv
    xq = x.astype(jnp.bfloat16).astype(jnp.float32)
    wq = weight.astype(jnp.bfloat16).astype(jnp.float32)
    ref = jax.lax.conv_general_dilated(
        xq, wq, window_strides=(STRIDE, STRIDE),
        padding=((PAD, PAD), (PAD, PAD)),
        dimension_numbers=("NCHW", "OIHW", "NCHW"),
        precision=jax.lax.Precision.HIGHEST,
    ) + bias.reshape(1, OC, 1, 1)
    ref = jax.block_until_ready(ref)

    assert out.shape == (N, OC, H // 2, W // 2), out.shape
    err = float(jnp.max(jnp.abs(out - ref)))
    assert err < 5e-3, err
    print("KERNEL_OK")
</pallas_src>

<mosaic_0001>
module attributes {stable_mosaic.version = 11 : i64} {
  func.func @kernel(%arg0: i32, %arg1: i32, %arg2: memref<1x8x2x9x8xbf16, #tpu.memory_space<vmem>>, %arg3: memref<1x1x2x9x8xbf16, #tpu.memory_space<vmem>>, %arg4: memref<64x8xbf16, #tpu.memory_space<vmem>>, %arg5: memref<1x8xf32, #tpu.memory_space<vmem>>, %arg6: memref<1x64x8xf32, #tpu.memory_space<vmem>>) attributes {dimension_semantics = [#tpu.dimension_semantics<parallel>, #tpu.dimension_semantics<parallel>], iteration_bounds = array<i64: 2, 1>, scalar_prefetch = 0 : i64, scratch_operands = 0 : i64, tpu.core_type = #tpu.core_type<tc>, window_params = [{transform_indices = @transform_0, window_bounds = array<i64: 1, 8, 2, 9, 8>}, {transform_indices = @transform_1, window_bounds = array<i64: 1, 1, 2, 9, 8>}, {pipeline_mode = #tpu.pipeline_mode<synchronous>, transform_indices = @transform_2, window_bounds = array<i64: 64, 8>}, {pipeline_mode = #tpu.pipeline_mode<synchronous>, transform_indices = @transform_3, window_bounds = array<i64: 1, 8>}, {transform_indices = @transform_4, window_bounds = array<i64: 1, 64, 8>}]} {
    %c0 = arith.constant 0 : index
    %c0_0 = arith.constant 0 : index
    %c0_1 = arith.constant 0 : index
    %c0_2 = arith.constant 0 : index
    %c0_3 = arith.constant 0 : index
    %0 = vector.load %arg2[%c0, %c0_0, %c0_1, %c0_2, %c0_3] : memref<1x8x2x9x8xbf16, #tpu.memory_space<vmem>>, vector<1x8x1x8x8xbf16>
    %1 = vector.shape_cast %0 : vector<1x8x1x8x8xbf16> to vector<8x8x8xbf16>
    %c0_4 = arith.constant 0 : index
    %c0_5 = arith.constant 0 : index
    %c0_6 = arith.constant 0 : index
    %c1 = arith.constant 1 : index
    %c0_7 = arith.constant 0 : index
    %2 = vector.load %arg2[%c0_4, %c0_5, %c0_6, %c1, %c0_7] : memref<1x8x2x9x8xbf16, #tpu.memory_space<vmem>>, vector<1x8x1x8x8xbf16>
    %3 = vector.shape_cast %2 : vector<1x8x1x8x8xbf16> to vector<8x8x8xbf16>
    %c0_8 = arith.constant 0 : index
    %c0_9 = arith.constant 0 : index
    %c1_10 = arith.constant 1 : index
    %c0_11 = arith.constant 0 : index
    %c0_12 = arith.constant 0 : index
    %4 = vector.load %arg2[%c0_8, %c0_9, %c1_10, %c0_11, %c0_12] : memref<1x8x2x9x8xbf16, #tpu.memory_space<vmem>>, vector<1x8x1x8x8xbf16>
    %5 = vector.shape_cast %4 : vector<1x8x1x8x8xbf16> to vector<8x8x8xbf16>
    %c0_13 = arith.constant 0 : index
    %c0_14 = arith.constant 0 : index
    %c1_15 = arith.constant 1 : index
    %c1_16 = arith.constant 1 : index
    %c0_17 = arith.constant 0 : index
    %6 = vector.load %arg2[%c0_13, %c0_14, %c1_15, %c1_16, %c0_17] : memref<1x8x2x9x8xbf16, #tpu.memory_space<vmem>>, vector<1x8x1x8x8xbf16>
    %7 = vector.shape_cast %6 : vector<1x8x1x8x8xbf16> to vector<8x8x8xbf16>
    %c0_18 = arith.constant 0 : index
    %c0_19 = arith.constant 0 : index
    %c0_20 = arith.constant 0 : index
    %c0_21 = arith.constant 0 : index
    %c0_22 = arith.constant 0 : index
    %8 = vector.load %arg3[%c0_18, %c0_19, %c0_20, %c0_21, %c0_22] : memref<1x1x2x9x8xbf16, #tpu.memory_space<vmem>>, vector<1x1x1x8x8xbf16>
    %9 = vector.shape_cast %8 : vector<1x1x1x8x8xbf16> to vector<1x8x8xbf16>
    %c0_23 = arith.constant 0 : index
    %c1_24 = arith.constant 1 : index
    %c0_25 = arith.constant 0 : index
    %c0_26 = arith.constant 0 : index
    %c0_27 = arith.constant 0 : index
    %10 = vector.load %arg2[%c0_23, %c1_24, %c0_25, %c0_26, %c0_27] : memref<1x8x2x9x8xbf16, #tpu.memory_space<vmem>>, vector<1x7x1x8x8xbf16>
    %11 = vector.shape_cast %10 : vector<1x7x1x8x8xbf16> to vector<7x8x8xbf16>
    %12 = tpu.concatenate %11, %9 in 0 : vector<7x8x8xbf16>, vector<1x8x8xbf16> -> vector<8x8x8xbf16>
    %c0_28 = arith.constant 0 : index
    %c0_29 = arith.constant 0 : index
    %c0_30 = arith.constant 0 : index
    %c1_31 = arith.constant 1 : index
    %c0_32 = arith.constant 0 : index
    %13 = vector.load %arg3[%c0_28, %c0_29, %c0_30, %c1_31, %c0_32] : memref<1x1x2x9x8xbf16, #tpu.memory_space<vmem>>, vector<1x1x1x8x8xbf16>
    %14 = vector.shape_cast %13 : vector<1x1x1x8x8xbf16> to vector<1x8x8xbf16>
    %c0_33 = arith.constant 0 : index
    %c1_34 = arith.constant 1 : index
    %c0_35 = arith.constant 0 : index
    %c1_36 = arith.constant 1 : index
    %c0_37 = arith.constant 0 : index
    %15 = vector.load %arg2[%c0_33, %c1_34, %c0_35, %c1_36, %c0_37] : memref<1x8x2x9x8xbf16, #tpu.memory_space<vmem>>, vector<1x7x1x8x8xbf16>
    %16 = vector.shape_cast %15 : vector<1x7x1x8x8xbf16> to vector<7x8x8xbf16>
    %17 = tpu.concatenate %16, %14 in 0 : vector<7x8x8xbf16>, vector<1x8x8xbf16> -> vector<8x8x8xbf16>
    %c0_38 = arith.constant 0 : index
    %c0_39 = arith.constant 0 : index
    %c1_40 = arith.constant 1 : index
    %c0_41 = arith.constant 0 : index
    %c0_42 = arith.constant 0 : index
    %18 = vector.load %arg3[%c0_38, %c0_39, %c1_40, %c0_41, %c0_42] : memref<1x1x2x9x8xbf16, #tpu.memory_space<vmem>>, vector<1x1x1x8x8xbf16>
    %19 = vector.shape_cast %18 : vector<1x1x1x8x8xbf16> to vector<1x8x8xbf16>
    %c0_43 = arith.constant 0 : index
    %c1_44 = arith.constant 1 : index
    %c1_45 = arith.constant 1 : index
    %c0_46 = arith.constant 0 : index
    %c0_47 = arith.constant 0 : index
    %20 = vector.load %arg2[%c0_43, %c1_44, %c1_45, %c0_46, %c0_47] : memref<1x8x2x9x8xbf16, #tpu.memory_space<vmem>>, vector<1x7x1x8x8xbf16>
    %21 = vector.shape_cast %20 : vector<1x7x1x8x8xbf16> to vector<7x8x8xbf16>
    %22 = tpu.concatenate %21, %19 in 0 : vector<7x8x8xbf16>, vector<1x8x8xbf16> -> vector<8x8x8xbf16>
    %c0_48 = arith.constant 0 : index
    %c0_49 = arith.constant 0 : index
    %c1_50 = arith.constant 1 : index
    %c1_51 = arith.constant 1 : index
    %c0_52 = arith.constant 0 : index
    %23 = vector.load %arg3[%c0_48, %c0_49, %c1_50, %c1_51, %c0_52] : memref<1x1x2x9x8xbf16, #tpu.memory_space<vmem>>, vector<1x1x1x8x8xbf16>
    %24 = vector.shape_cast %23 : vector<1x1x1x8x8xbf16> to vector<1x8x8xbf16>
    %c0_53 = arith.constant 0 : index
    %c1_54 = arith.constant 1 : index
    %c1_55 = arith.constant 1 : index
    %c1_56 = arith.constant 1 : index
    %c0_57 = arith.constant 0 : index
    %25 = vector.load %arg2[%c0_53, %c1_54, %c1_55, %c1_56, %c0_57] : memref<1x8x2x9x8xbf16, #tpu.memory_space<vmem>>, vector<1x7x1x8x8xbf16>
    %26 = vector.shape_cast %25 : vector<1x7x1x8x8xbf16> to vector<7x8x8xbf16>
    %27 = tpu.concatenate %26, %24 in 0 : vector<7x8x8xbf16>, vector<1x8x8xbf16> -> vector<8x8x8xbf16>
    %28 = tpu.concatenate %1, %3, %5, %7, %12, %17, %22, %27 in 2 : vector<8x8x8xbf16>, vector<8x8x8xbf16>, vector<8x8x8xbf16>, vector<8x8x8xbf16>, vector<8x8x8xbf16>, vector<8x8x8xbf16>, vector<8x8x8xbf16>, vector<8x8x8xbf16> -> vector<8x8x64xbf16>
    %29 = vector.shape_cast %28 : vector<8x8x64xbf16> to vector<64x64xbf16>
    %c0_58 = arith.constant 0 : index
    %c0_59 = arith.constant 0 : index
    %30 = vector.load %arg4[%c0_58, %c0_59] : memref<64x8xbf16, #tpu.memory_space<vmem>>, vector<64x8xbf16>
    %cst = arith.constant dense<0.000000e+00> : vector<64x8xf32>
    %31 = tpu.matmul %29, %30, %cst {dimension_numbers = #tpu.dot_dimension_numbers<[1], [0], [0], [1], [0, 0, 1, 1], [], []>} : vector<64x64xbf16>, vector<64x8xbf16>, vector<64x8xf32> -> vector<64x8xf32>
    %c0_60 = arith.constant 0 : index
    %c0_61 = arith.constant 0 : index
    %32 = vector.load %arg5[%c0_60, %c0_61] : memref<1x8xf32, #tpu.memory_space<vmem>>, vector<1x8xf32>
    %33 = vector.broadcast %32 : vector<1x8xf32> to vector<64x8xf32>
    %34 = arith.addf %31, %33 : vector<64x8xf32>
    %c0_62 = arith.constant 0 : index
    %c0_63 = arith.constant 0 : index
    %c0_64 = arith.constant 0 : index
    %35 = vector.load %arg6[%c0_62, %c0_63, %c0_64] : memref<1x64x8xf32, #tpu.memory_space<vmem>>, vector<1x64x8xf32>
    %36 = vector.shape_cast %35 : vector<1x64x8xf32> to vector<64x8xf32>
    %37 = vector.shape_cast %34 : vector<64x8xf32> to vector<1x64x8xf32>
    tpu.vector_store %arg6[%c0_62, %c0_63, %c0_64], %37 {strides = array<i32>} : memref<1x64x8xf32, #tpu.memory_space<vmem>>, vector<1x64x8xf32>,
    return
  }
  func.func @transform_0(%arg0: i32, %arg1: i32) -> (i32, i32, i32, i32, i32) {
    %c0_i32 = arith.constant 0 : i32
    %c0_i32_0 = arith.constant 0 : i32
    %c0_i32_1 = arith.constant 0 : i32
    %c0_i32_2 = arith.constant 0 : i32
    return %arg0, %arg1, %c0_i32, %c0_i32_0, %c0_i32_1 : i32, i32, i32, i32, i32
  }
  func.func @transform_1(%arg0: i32, %arg1: i32) -> (i32, i32, i32, i32, i32) {
    %c1_i32 = arith.constant 1 : i32
    %0 = arith.addi %arg1, %c1_i32 : i32
    %c8_i32 = arith.constant 8 : i32
    %1 = arith.muli %c8_i32, %0 : i32
    %c0_i32 = arith.constant 0 : i32
    %c0_i32_0 = arith.constant 0 : i32
    %c0_i32_1 = arith.constant 0 : i32
    %c0_i32_2 = arith.constant 0 : i32
    return %arg0, %1, %c0_i32, %c0_i32_0, %c0_i32_1 : i32, i32, i32, i32, i32
  }
  func.func @transform_2(%arg0: i32, %arg1: i32) -> (i32, i32) {
    %c0_i32 = arith.constant 0 : i32
    %c0_i32_0 = arith.constant 0 : i32
    %c0_i32_1 = arith.constant 0 : i32
    return %c0_i32, %c0_i32_0 : i32, i32
  }
  func.func @transform_3(%arg0: i32, %arg1: i32) -> (i32, i32) {
    %c0_i32 = arith.constant 0 : i32
    %c0_i32_0 = arith.constant 0 : i32
    %c0_i32_1 = arith.constant 0 : i32
    return %c0_i32, %c0_i32_0 : i32, i32
  }
  func.func @transform_4(%arg0: i32, %arg1: i32) -> (i32, i32, i32) {
    %c0_i32 = arith.constant 0 : i32
    %c0_i32_0 = arith.constant 0 : i32
    return %arg0, %arg1, %c0_i32 : i32, i32, i32
  }
}

</mosaic_0001>

<llo_original>
// kernel: downsampler_forward.1
$region0: #{downsampler_forward.1}
  #allocation0 [shape = 'u32[]', space=smem, size = 0x4, offset = 0x4, fixed_abs, tag = 'smem constant byte address 0x4 - core index']
  #allocation1 [shape = 'u32[144,128]{1,0:T(1,128)}', space=vmem, size = 0x12000, scoped, tag = 'internal scratch']
  %s0 = inlined_call_operand.vmem [shape: bf16[2,9,2,9,8], index: 0, kind: input, shape index: {}, may-alias: {0,1}]
  %s1 = inlined_call_operand.vmem [shape: bf16[2,9,2,9,8], index: 1, kind: input, shape index: {}, may-alias: {0,1}]
  %s2 = inlined_call_operand.vmem [shape: bf16[64,8], index: 2, kind: input, shape index: {}]
  %s3 = inlined_call_operand.vmem [shape: f32[1,8], index: 3, kind: input, shape index: {}]
  %s4 = inlined_call_operand.vmem [shape: f32[2,64,8], index: 4, kind: output, shape index: {}]
  %s5 = sld [smem:[#allocation0]]
  $region49: #{downsampler_forward.1} parent=0
    _
  %s7 = ssub.s32 1, %s5
  %s8 = scalar_select 0, %s7, %s5
  loop: start=0, step=1, limit=4
  $region2: #{downsampler_forward.1} parent=0 // loop_pre_header
    _
  $region3: #{downsampler_forward.1} parent=0 // loop_header
    %s10 = sphi 0, %s14
    %p11 = scmp.ge.s32.totalorder %s10, 4
    %s17 = sphi 0, %s29
    %s18 = sphi 0, %s25
    %s19 = sphi 0, %s17
    %s20 = sphi 0, %s18
    %s21 = sphi 0, %s19
    %s22 = sphi 0, %s20
    %s34 = sphi 0, %s36
    %s37 = sphi 0, %s34
    %s38 = sphi 0, %s37
    %s54 = sphi 0, %s38
    %s66 = sphi 0, %s68
    %s69 = sphi 0, %s66
    %s70 = sphi 0, %s69
    %s86 = sphi 0, %s70
    %s90 = sphi 0, %s90
    %s92 = sphi 0, %s90
    %s93 = sphi 0, %s92
    %s107 = sphi 0, %s93
    %s111 = sphi 0, %s111
    %s113 = sphi 0, %s111
    %s114 = sphi 0, %s113
    %s128 = sphi 0, %s114
    %s136 = sphi 0, %s138
    %s139 = sphi 0, %s136
    %s140 = sphi 0, %s139
    %s156 = sphi 0, %s140
  $region4: #{downsampler_forward.1} parent=0 // loop_header_branch
    %13 = sbr.rel (%p11) target = $region8
  $region5: #{downsampler_forward.1} parent=0 // loop_body
    %s15 = ssub.s32 %s10, 1
    %s16 = ssub.s32 %s10, 2
    %s23 = sadd.s32 1, %s18
    %p24 = scmp.ge.s32.totalorder %s23, 1
    %s25 = scalar_select %p24, 0, %s23
    %s26 = sadd.s32 1, %s17
    %s27 = scalar_select %p24, %s26, %s17
    %p28 = scmp.ge.s32.totalorder %s27, 2
    %s29 = scalar_select %p28, 0, %s27
    %s30 = ssub.s32 %s17, %s29
    %s31 = ssub.s32 %s18, %s25
    %s32 = sor.u32 %s30, %s31
    %p33 = scmp.eq.s32.totalorder %s32, 0
    %s35 = sadd.s32 %s34, 1
    %s36 = scalar_select %p33, %s34, %s35
    %p39 = pneg %p33
    %p40 = scmp.eq.s32.totalorder %s10, 1
    %p41 = por %p39, %p40
    %p42 = scmp.ne.s32.totalorder %s34, %s37
    %p43 = scmp.eq.s32.totalorder %s10, 0
    %p44 = por %p42, %p43
    %p45 = scmp.ne.s32.totalorder %s34, %s37
    %p46 = scmp.eq.s32.totalorder %s15, 1
    %p47 = por %p45, %p46
    %p48 = scmp.ne.s32.totalorder %s37, %s38
    %p49 = scmp.eq.s32.totalorder %s15, 0
    %p50 = por %p48, %p49
    %p51 = scmp.ne.s32.totalorder %s37, %s38
    %p52 = scmp.eq.s32.totalorder %s16, 1
    %p53 = por %p51, %p52
    %p55 = scmp.ne.s32.totalorder %s38, %s54
    %p56 = scmp.eq.s32.totalorder %s16, 0
    %p57 = por %p55, %p56
    %s58 = sadd.s32 %s18, 1
    %s59 = smul.u32 %s58, 8
    %s60 = sadd.s32 %s25, 1
    %s61 = smul.u32 %s60, 8
    %s62 = ssub.s32 %s17, %s29
    %s63 = ssub.s32 %s59, %s61
    %s64 = sor.u32 %s62, %s63
    %p65 = scmp.eq.s32.totalorder %s64, 0
    %s67 = sadd.s32 %s66, 1
    %s68 = scalar_select %p65, %s66, %s67
    %p71 = pneg %p65
    %p72 = scmp.eq.s32.totalorder %s10, 1
    %p73 = por %p71, %p72
    %p74 = scmp.ne.s32.totalorder %s66, %s69
    %p75 = scmp.eq.s32.totalorder %s10, 0
    %p76 = por %p74, %p75
    %p77 = scmp.ne.s32.totalorder %s66, %s69
    %p78 = scmp.eq.s32.totalorder %s15, 1
    %p79 = por %p77, %p78
    %p80 = scmp.ne.s32.totalorder %s69, %s70
    %p81 = scmp.eq.s32.totalorder %s15, 0
    %p82 = por %p80, %p81
    %p83 = scmp.ne.s32.totalorder %s69, %s70
    %p84 = scmp.eq.s32.totalorder %s16, 1
    %p85 = por %p83, %p84
    %p87 = scmp.ne.s32.totalorder %s70, %s86
    %p88 = scmp.eq.s32.totalorder %s16, 0
    %p89 = por %p87, %p88
    %s91 = sadd.s32 %s90, 1
    %p94 = scmp.eq.s32.totalorder %s10, 1
    %p95 = scmp.ne.s32.totalorder %s90, %s92
    %p96 = scmp.eq.s32.totalorder %s10, 0
    %p97 = por %p95, %p96
    %p98 = scmp.ne.s32.totalorder %s90, %s92
    %p99 = scmp.eq.s32.totalorder %s15, 1
    %p100 = por %p98, %p99
    %p101 = scmp.ne.s32.totalorder %s92, %s93
    %p102 = scmp.eq.s32.totalorder %s15, 0
    %p103 = por %p101, %p102
    %p104 = scmp.ne.s32.totalorder %s92, %s93
    %p105 = scmp.eq.s32.totalorder %s16, 1
    %p106 = por %p104, %p105
    %p108 = scmp.ne.s32.totalorder %s93, %s107
    %p109 = scmp.eq.s32.totalorder %s16, 0
    %p110 = por %p108, %p109
    %s112 = sadd.s32 %s111, 1
    %p115 = scmp.eq.s32.totalorder %s10, 1
    %p116 = scmp.ne.s32.totalorder %s111, %s113
    %p117 = scmp.eq.s32.totalorder %s10, 0
    %p118 = por %p116, %p117
    %p119 = scmp.ne.s32.totalorder %s111, %s113
    %p120 = scmp.eq.s32.totalorder %s15, 1
    %p121 = por %p119, %p120
    %p122 = scmp.ne.s32.totalorder %s113, %s114
    %p123 = scmp.eq.s32.totalorder %s15, 0
    %p124 = por %p122, %p123
    %p125 = scmp.ne.s32.totalorder %s113, %s114
    %p126 = scmp.eq.s32.totalorder %s16, 1
    %p127 = por %p125, %p126
    %p129 = scmp.ne.s32.totalorder %s114, %s128
    %p130 = scmp.eq.s32.totalorder %s16, 0
    %p131 = por %p129, %p130
    %s132 = ssub.s32 %s17, %s29
    %s133 = ssub.s32 %s18, %s25
    %s134 = sor.u32 %s132, %s133
    %p135 = scmp.eq.s32.totalorder %s134, 0
    %s137 = sadd.s32 %s136, 1
    %s138 = scalar_select %p135, %s136, %s137
    %p141 = pneg %p135
    %p142 = scmp.eq.s32.totalorder %s10, 1
    %p143 = por %p141, %p142
    %p144 = scmp.ne.s32.totalorder %s136, %s139
    %p145 = scmp.eq.s32.totalorder %s10, 0
    %p146 = por %p144, %p145
    %p147 = scmp.ne.s32.totalorder %s136, %s139
    %p148 = scmp.eq.s32.totalorder %s15, 1
    %p149 = por %p147, %p148
    %p150 = scmp.ne.s32.totalorder %s139, %s140
    %p151 = scmp.eq.s32.totalorder %s15, 0
    %p152 = por %p150, %p151
    %p153 = scmp.ne.s32.totalorder %s139, %s140
    %p154 = scmp.eq.s32.totalorder %s16, 1
    %p155 = por %p153, %p154
    %p157 = scmp.ne.s32.totalorder %s140, %s156
    %p158 = scmp.eq.s32.totalorder %s16, 0
    %p159 = por %p157, %p158
    %p160 = scmp.le.s32.totalorder 1, %s10
    %p161 = scmp.lt.s32.totalorder %s10, 3
    %p162 = pnand %p160, %p161
    %p163 = pneg %p162
    // Predicated region
    $region9: #{downsampler_forward.1} parent=5 // pred_check
      _
    $region10: #{downsampler_forward.1} parent=5 // pred_check_branch
      %165 = sbr.rel (%p162) target = $region12
    $region11: #{downsampler_forward.1} parent=5 // pred_region
      %s166 = ssub.s32 %s10, 1
      // Predicated region
      $region13: #{downsampler_forward.1} parent=11 // pred_check
        %p167 = pneg %p103
      $region14: #{downsampler_forward.1} parent=11 // pred_check_branch
        %169 = sbr.rel (%p167) target = $region16
      $region15: #{downsampler_forward.1} parent=11 // pred_region
        _
      $region16: #{downsampler_forward.1} parent=11 // pred_fallthru
        _
      // Predicated region
      $region17: #{downsampler_forward.1} parent=11 // pred_check
        %p170 = pneg %p124
      $region18: #{downsampler_forward.1} parent=11 // pred_check_branch
        %172 = sbr.rel (%p170) target = $region20
      $region19: #{downsampler_forward.1} parent=11 // pred_region
        _
      $region20: #{downsampler_forward.1} parent=11 // pred_fallthru
        _
    $region12: #{downsampler_forward.1} parent=5 // pred_fallthru
      _
    %p173 = scmp.lt.s32.totalorder %s10, 2
    // Predicated region
    $region21: #{downsampler_forward.1} parent=5 // pred_check
      %p174 = pneg %p173
    $region22: #{downsampler_forward.1} parent=5 // pred_check_branch
      %176 = sbr.rel (%p174) target = $region24
    $region23: #{downsampler_forward.1} parent=5 // pred_region
      // Predicated region
      $region25: #{downsampler_forward.1} parent=23 // pred_check
        %p177 = pneg %p44
      $region26: #{downsampler_forward.1} parent=23 // pred_check_branch
        %179 = sbr.rel (%p177) target = $region28
      $region27: #{downsampler_forward.1} parent=23 // pred_region
        %s180 = smul.u32 8, %s18
        %s181 = ssub.s32 9, %s180
        %p182 = scmp.lt.s32.totalorder %s181, 8
        %s183 = scalar_select %p182, %s181, 8
        %s184 = smul.u32 64, %s183
        %s185 = smul.u32 %s184, 2
        %s186 = smul.u32 %s185, 2
        %p187 = scmp.lt.s32.totalorder %s17, 1
        %s188 = scalar_select %p187, %s17, 1
        %p189 = scmp.lt.s32.totalorder %s180, 8
        %s190 = scalar_select %p189, %s180, 8
        %s191 = smul.addr %s190, 4
        %s192 = smul.addr %s188, 36
        %s193 = sadd.s32 %s191, %s192
        %s194 = smul.addr %s193, 4
        %s195 = scalar_lea.vmem %s0, %s194
        %s196 = smul.u32 8, %s18
        %s197 = ssub.s32 9, %s196
        %p198 = scmp.lt.s32.totalorder %s197, 8
        %s199 = scalar_select %p198, %s197, 8
        %s200 = smul.u32 64, %s199
        %s201 = smul.u32 %s200, 2
        %s202 = smul.u32 %s201, 2
      $region28: #{downsampler_forward.1} parent=23 // pred_fallthru
        _
      // Predicated region
      $region29: #{downsampler_forward.1} parent=23 // pred_check
        %p203 = pneg %p76
      $region30: #{downsampler_forward.1} parent=23 // pred_check_branch
        %205 = sbr.rel (%p203) target = $region32
      $region31: #{downsampler_forward.1} parent=23 // pred_region
        %s206 = sadd.s32 %s18, 1
        %s207 = smul.u32 %s206, 8
        %p208 = scmp.lt.s32.totalorder %s17, 1
        %s209 = scalar_select %p208, %s17, 1
        %p210 = scmp.lt.s32.totalorder %s207, 8
        %s211 = scalar_select %p210, %s207, 8
        %s212 = smul.addr %s211, 4
        %s213 = smul.addr %s209, 36
        %s214 = sadd.s32 %s212, %s213
        %s215 = smul.addr %s214, 4
        %s216 = scalar_lea.vmem %s1, %s215
        %s217 = sadd.s32 %s18, 1
        %s218 = smul.u32 %s217, 8
      $region32: #{downsampler_forward.1} parent=23 // pred_fallthru
        _
    $region24: #{downsampler_forward.1} parent=5 // pred_fallthru
      _
    %p219 = scmp.le.s32.totalorder 1, %s10
    %p220 = scmp.lt.s32.totalorder %s10, 3
    %p221 = pnand %p219, %p220
    %p222 = pneg %p221
    // Predicated region
    $region33: #{downsampler_forward.1} parent=5 // pred_check
      _
    $region34: #{downsampler_forward.1} parent=5 // pred_check_branch
      %224 = sbr.rel (%p221) target = $region36
    $region35: #{downsampler_forward.1} parent=5 // pred_region
      %s225 = ssub.s32 %s10, 1
      %s226 = smul.u32 8, %s20
      %s227 = ssub.s32 9, %s226
      %p228 = scmp.lt.s32.totalorder %s227, 8
      %s229 = scalar_select %p228, %s227, 8
      %s230 = smul.u32 64, %s229
      %s231 = smul.u32 %s230, 2
      %s232 = smul.u32 %s231, 2
      %p233 = scmp.lt.s32.totalorder %s19, 1
      %s234 = scalar_select %p233, %s19, 1
      %p235 = scmp.lt.s32.totalorder %s226, 8
      %s236 = scalar_select %p235, %s226, 8
      %s237 = smul.addr %s236, 4
      %s238 = smul.addr %s234, 36
      %s239 = sadd.s32 %s237, %s238
      %s240 = smul.addr %s239, 4
      %s241 = scalar_lea.vmem %s0, %s240
      %p242 = pneg %p50
      %p243 = pneg %p47
      %s244 = sadd.s32 %s20, 1
      %s245 = smul.u32 %s244, 8
      %p246 = scmp.lt.s32.totalorder %s19, 1
      %s247 = scalar_select %p246, %s19, 1
      %p248 = scmp.lt.s32.totalorder %s245, 8
      %s249 = scalar_select %p248, %s245, 8
      %s250 = smul.addr %s249, 4
      %s251 = smul.addr %s247, 36
      %s252 = sadd.s32 %s250, %s251
      %s253 = smul.addr %s252, 4
      %s254 = scalar_lea.vmem %s1, %s253
      %p255 = pneg %p82
      %p256 = pneg %p79
      %p257 = pneg %p103
      %p258 = pneg %p100
      %p259 = pneg %p124
      %p260 = pneg %p121
      %p261 = pneg %p152
      %p262 = pneg %p149
      %s263 = smul.u32 8, %s20
      %p264 = scmp.lt.s32.totalorder %s19, 1
      %s265 = scalar_select %p264, %s19, 1
      %p266 = scmp.lt.s32.totalorder %s263, 7
      %s267 = scalar_select %p266, %s263, 7
      %s268 = smul.addr %s265, 8
      %s269 = sadd.s32 %s267, %s268
      %s270 = smul.addr %s269, 8
      %s271 = scalar_lea.vmem %s4, %s270
      %s272 = smul.u32 8, %s20
      %s273 = ssub.s32 9, %s272
      %p274 = scmp.lt.s32.totalorder %s273, 8
      %s275 = scalar_select %p274, %s273, 8
      %s276 = smul.u32 64, %s275
      %s277 = smul.u32 %s276, 2
      %s278 = smul.u32 %s277, 2
      %p279 = scmp.lt.s32.totalorder %s19, 1
      %s280 = scalar_select %p279, %s19, 1
      %p281 = scmp.lt.s32.totalorder %s272, 8
      %s282 = scalar_select %p281, %s272, 8
      %s283 = smul.addr %s282, 4
      %s284 = smul.addr %s280, 36
      %s285 = sadd.s32 %s283, %s284
      %s286 = smul.addr %s285, 4
      %s287 = scalar_lea.vmem %s0, %s286
      %s288 = smul.u32 8, %s20
      %s289 = ssub.s32 9, %s288
      %p290 = scmp.lt.s32.totalorder %s289, 8
      %s291 = scalar_select %p290, %s289, 8
      %s292 = smul.u32 64, %s291
      %s293 = smul.u32 %s292, 2
      %s294 = smul.u32 %s293, 2
      %s295 = sadd.s32 %s20, 1
      %s296 = smul.u32 %s295, 8
      %p297 = scmp.lt.s32.totalorder %s19, 1
      %s298 = scalar_select %p297, %s19, 1
      %p299 = scmp.lt.s32.totalorder %s296, 8
      %s300 = scalar_select %p299, %s296, 8
      %s301 = smul.addr %s300, 4
      %s302 = smul.addr %s298, 36
      %s303 = sadd.s32 %s301, %s302
      %s304 = smul.addr %s303, 4
      %s305 = scalar_lea.vmem %s1, %s304
      %s306 = sadd.s32 %s20, 1
      %s307 = smul.u32 %s306, 8
      %s308 = smul.u32 8, %s20
      %p309 = scmp.lt.s32.totalorder %s19, 1
      %s310 = scalar_select %p309, %s19, 1
      %p311 = scmp.lt.s32.totalorder %s308, 7
      %s312 = scalar_select %p311, %s308, 7
      %s313 = smul.addr %s310, 8
      %s314 = sadd.s32 %s312, %s313
      %s315 = smul.addr %s314, 8
      %s316 = scalar_lea.vmem %s4, %s315
      %s317 = smul.u32 8, %s20
      %v319 = vld [vmem:[%s287] sm:$0xf]
      %v320 = vld [vmem:[%s287 + $0x10] sm:$0xf]
      %v321 = vld [vmem:[%s287 + $0x20] sm:$0xf]
      %v322 = vld [vmem:[%s287 + $0x30] sm:$0xf]
      %v323 = vld [vmem:[%s287 + $0x40] sm:$0xf]
      %v324 = vld [vmem:[%s287 + $0x50] sm:$0xf]
      %v325 = vld [vmem:[%s287 + $0x60] sm:$0xf]
      %v326 = vld [vmem:[%s287 + $0x70] sm:$0xf]
      %v327 = vld [vmem:[%s287 + $0x4] sm:$0x1]
      %v328 = vld [vmem:[%s287 + $0x14] sm:$0x1]
      %v329 = vld [vmem:[%s287 + $0x24] sm:$0x1]
      %v330 = vld [vmem:[%s287 + $0x34] sm:$0x1]
      %v331 = vld [vmem:[%s287 + $0x44] sm:$0x1]
      %v332 = vld [vmem:[%s287 + $0x54] sm:$0x1]
      %v333 = vld [vmem:[%s287 + $0x64] sm:$0x1]
      %v334 = vld [vmem:[%s287 + $0x74] sm:$0x1]
      %s335 = scalar_lea.vmem %s287, 8
      %v336 = vld [vmem:[%s335] sm:$0xf]
      %v337 = vld [vmem:[%s335 + $0x10] sm:$0xf]
      %v338 = vld [vmem:[%s335 + $0x20] sm:$0xf]
      %v339 = vld [vmem:[%s335 + $0x30] sm:$0xf]
      %v340 = vld [vmem:[%s335 + $0x40] sm:$0xf]
      %v341 = vld [vmem:[%s335 + $0x50] sm:$0xf]
      %v342 = vld [vmem:[%s335 + $0x60] sm:$0xf]
      %v343 = vld [vmem:[%s335 + $0x70] sm:$0xf]
      %v344 = vld [vmem:[%s335 + $0x4] sm:$0x1]
      %v345 = vld [vmem:[%s335 + $0x14] sm:$0x1]
      %v346 = vld [vmem:[%s335 + $0x24] sm:$0x1]
      %v347 = vld [vmem:[%s335 + $0x34] sm:$0x1]
      %v348 = vld [vmem:[%s335 + $0x44] sm:$0x1]
      %v349 = vld [vmem:[%s335 + $0x54] sm:$0x1]
      %v350 = vld [vmem:[%s335 + $0x64] sm:$0x1]
      %v351 = vld [vmem:[%s335 + $0x74] sm:$0x1]
      %v352 = vld [vmem:[%s305] sm:$0xf]
      %s353 = scalar_lea.vmem %s287, 16
      %v354 = vld [vmem:[%s353] sm:$0xf]
      %v355 = vld [vmem:[%s353 + $0x10] sm:$0xf]
      %v356 = vld [vmem:[%s353 + $0x20] sm:$0xf]
      %v357 = vld [vmem:[%s353 + $0x30] sm:$0xf]
      %v358 = vld [vmem:[%s353 + $0x40] sm:$0xf]
      %v359 = vld [vmem:[%s353 + $0x50] sm:$0xf]
      %v360 = vld [vmem:[%s353 + $0x60] sm:$0xf]
      %v361 = vld [vmem:[%s305 + $0x4] sm:$0x1]
      %v362 = vld [vmem:[%s353 + $0x4] sm:$0x1]
      %v363 = vld [vmem:[%s353 + $0x14] sm:$0x1]
      %v364 = vld [vmem:[%s353 + $0x24] sm:$0x1]
      %v365 = vld [vmem:[%s353 + $0x34] sm:$0x1]
      %v366 = vld [vmem:[%s353 + $0x44] sm:$0x1]
      %v367 = vld [vmem:[%s353 + $0x54] sm:$0x1]
      %v368 = vld [vmem:[%s353 + $0x64] sm:$0x1]
      %s369 = scalar_lea.vmem %s305, 8
      %v370 = vld [vmem:[%s369] sm:$0xf]
      %s371 = scalar_lea.vmem %s287, 24
      %v372 = vld [vmem:[%s371] sm:$0xf]
      %v373 = vld [vmem:[%s371 + $0x10] sm:$0xf]
      %v374 = vld [vmem:[%s371 + $0x20] sm:$0xf]
      %v375 = vld [vmem:[%s371 + $0x30] sm:$0xf]
      %v376 = vld [vmem:[%s371 + $0x40] sm:$0xf]
      %v377 = vld [vmem:[%s371 + $0x50] sm:$0xf]
      %v378 = vld [vmem:[%s371 + $0x60] sm:$0xf]
      %v379 = vld [vmem:[%s369 + $0x4] sm:$0x1]
      %v380 = vld [vmem:[%s371 + $0x4] sm:$0x1]
      %v381 = vld [vmem:[%s371 + $0x14] sm:$0x1]
      %v382 = vld [vmem:[%s371 + $0x24] sm:$0x1]
      %v383 = vld [vmem:[%s371 + $0x34] sm:$0x1]
      %v384 = vld [vmem:[%s371 + $0x44] sm:$0x1]
      %v385 = vld [vmem:[%s371 + $0x54] sm:$0x1]
      %v386 = vld [vmem:[%s371 + $0x64] sm:$0x1]
      %v403 = vunpack.c.l.b16 %v319
      %v404 = vunpack.c.l.b16 %v327
      %v405 = vunpack.c.l.b16 %v320
      %v406 = vunpack.c.l.b16 %v328
      %v407 = vunpack.c.l.b16 %v321
      %v408 = vunpack.c.l.b16 %v329
      %v409 = vunpack.c.l.b16 %v322
      %v410 = vunpack.c.l.b16 %v330
      %v411 = vunpack.c.l.b16 %v323
      %v412 = vunpack.c.l.b16 %v331
      %v413 = vunpack.c.l.b16 %v324
      %v414 = vunpack.c.l.b16 %v332
      %v415 = vunpack.c.l.b16 %v325
      %v416 = vunpack.c.l.b16 %v333
      %v417 = vunpack.c.l.b16 %v326
      %v418 = vunpack.c.l.b16 %v334
      %v419 = vpack.c.b16 %v404, %v403
      %v420 = vpack.c.b16 %v406, %v405
      %v421 = vpack.c.b16 %v408, %v407
      %v422 = vpack.c.b16 %v410, %v409
      %v423 = vpack.c.b16 %v412, %v411
      %v424 = vpack.c.b16 %v414, %v413
      %v425 = vpack.c.b16 %v416, %v415
      %v426 = vpack.c.b16 %v418, %v417
      %v428 = vshrl.u32 %v419, 16
      %v430 = vshll.u32 %v419, 16
      %v432 = vrot.slane %v430, 1
      %v433 = vor.u32 %v428, %v432
      %v435 = vshrl.u32 %v420, 16
      %v437 = vshll.u32 %v420, 16
      %v439 = vrot.slane %v437, 1
      %v440 = vor.u32 %v435, %v439
      %v442 = vshrl.u32 %v421, 16
      %v444 = vshll.u32 %v421, 16
      %v446 = vrot.slane %v444, 1
      %v447 = vor.u32 %v442, %v446
      %v449 = vshrl.u32 %v422, 16
      %v451 = vshll.u32 %v422, 16
      %v453 = vrot.slane %v451, 1
      %v454 = vor.u32 %v449, %v453
      %v456 = vshrl.u32 %v423, 16
      %v458 = vshll.u32 %v423, 16
      %v460 = vrot.slane %v458, 1
      %v461 = vor.u32 %v456, %v460
      %v463 = vshrl.u32 %v424, 16
      %v465 = vshll.u32 %v424, 16
      %v467 = vrot.slane %v465, 1
      %v468 = vor.u32 %v463, %v467
      %v470 = vshrl.u32 %v425, 16
      %v472 = vshll.u32 %v425, 16
      %v474 = vrot.slane %v472, 1
      %v475 = vor.u32 %v470, %v474
      %v477 = vshrl.u32 %v426, 16
      %v479 = vshll.u32 %v426, 16
      %v481 = vrot.slane %v479, 1
      %v482 = vor.u32 %v477, %v481
      %483 = vrot.lane.b32.xlu0 %v433, 8
      %v484 = vpop.permute.xlu0 %483
      %485 = vrot.lane.b32.xlu0 %v440, 8
      %v486 = vpop.permute.xlu0 %485
      %487 = vrot.lane.b32.xlu0 %v447, 8
      %v488 = vpop.permute.xlu0 %487
      %489 = vrot.lane.b32.xlu0 %v454, 8
      %v490 = vpop.permute.xlu0 %489
      %491 = vrot.lane.b32.xlu0 %v461, 8
      %v492 = vpop.permute.xlu0 %491
      %493 = vrot.lane.b32.xlu0 %v468, 8
      %v494 = vpop.permute.xlu0 %493
      %495 = vrot.lane.b32.xlu0 %v475, 8
      %v496 = vpop.permute.xlu0 %495
      %497 = vrot.lane.b32.xlu0 %v482, 8
      %v498 = vpop.permute.xlu0 %497
      %v507 = vunpack.c.l.b16 %v336
      %v508 = vunpack.c.l.b16 %v337
      %v509 = vunpack.c.l.b16 %v338
      %v510 = vunpack.c.l.b16 %v339
      %v511 = vunpack.c.l.b16 %v340
      %v512 = vunpack.c.l.b16 %v341
      %v513 = vunpack.c.l.b16 %v342
      %v514 = vunpack.c.l.b16 %v343
      %v515 = vpack.c.b16 %v507, %v507
      %v516 = vpack.c.b16 %v508, %v508
      %v517 = vpack.c.b16 %v509, %v509
      %v518 = vpack.c.b16 %v510, %v510
      %v519 = vpack.c.b16 %v511, %v511
      %v520 = vpack.c.b16 %v512, %v512
      %v521 = vpack.c.b16 %v513, %v513
      %v522 = vpack.c.b16 %v514, %v514
      %523 = vrot.lane.b32.xlu0 %v515, 16
      %v524 = vpop.permute.xlu0 %523
      %525 = vrot.lane.b32.xlu0 %v516, 16
      %v526 = vpop.permute.xlu0 %525
      %527 = vrot.lane.b32.xlu0 %v517, 16
      %v528 = vpop.permute.xlu0 %527
      %529 = vrot.lane.b32.xlu0 %v518, 16
      %v530 = vpop.permute.xlu0 %529
      %531 = vrot.lane.b32.xlu0 %v519, 16
      %v532 = vpop.permute.xlu0 %531
      %533 = vrot.lane.b32.xlu0 %v520, 16
      %v534 = vpop.permute.xlu0 %533
      %535 = vrot.lane.b32.xlu0 %v521, 16
      %v536 = vpop.permute.xlu0 %535
      %537 = vrot.lane.b32.xlu0 %v522, 16
      %v538 = vpop.permute.xlu0 %537
      %v547 = vunpack.c.l.b16 %v344
      %v548 = vunpack.c.l.b16 %v345
      %v549 = vunpack.c.l.b16 %v346
      %v550 = vunpack.c.l.b16 %v347
      %v551 = vunpack.c.l.b16 %v348
      %v552 = vunpack.c.l.b16 %v349
      %v553 = vunpack.c.l.b16 %v350
      %v554 = vunpack.c.l.b16 %v351
      %v555 = vpack.c.b16 %v547, %v507
      %v556 = vpack.c.b16 %v548, %v508
      %v557 = vpack.c.b16 %v549, %v509
      %v558 = vpack.c.b16 %v550, %v510
      %v559 = vpack.c.b16 %v551, %v511
      %v560 = vpack.c.b16 %v552, %v512
      %v561 = vpack.c.b16 %v553, %v513
      %v562 = vpack.c.b16 %v554, %v514
      %v564 = vshrl.u32 %v555, 16
      %v566 = vshll.u32 %v555, 16
      %v568 = vrot.slane %v566, 1
      %v569 = vor.u32 %v564, %v568
      %v571 = vshrl.u32 %v556, 16
      %v573 = vshll.u32 %v556, 16
      %v575 = vrot.slane %v573, 1
      %v576 = vor.u32 %v571, %v575
      %v578 = vshrl.u32 %v557, 16
      %v580 = vshll.u32 %v557, 16
      %v582 = vrot.slane %v580, 1
      %v583 = vor.u32 %v578, %v582
      %v585 = vshrl.u32 %v558, 16
      %v587 = vshll.u32 %v558, 16
      %v589 = vrot.slane %v587, 1
      %v590 = vor.u32 %v585, %v589
      %v592 = vshrl.u32 %v559, 16
      %v594 = vshll.u32 %v559, 16
      %v596 = vrot.slane %v594, 1
      %v597 = vor.u32 %v592, %v596
      %v599 = vshrl.u32 %v560, 16
      %v601 = vshll.u32 %v560, 16
      %v603 = vrot.slane %v601, 1
      %v604 = vor.u32 %v599, %v603
      %v606 = vshrl.u32 %v561, 16
      %v608 = vshll.u32 %v561, 16
      %v610 = vrot.slane %v608, 1
      %v611 = vor.u32 %v606, %v610
      %v613 = vshrl.u32 %v562, 16
      %v615 = vshll.u32 %v562, 16
      %v617 = vrot.slane %v615, 1
      %v618 = vor.u32 %v613, %v617
      %619 = vrot.lane.b32.xlu0 %v569, 24
      %v620 = vpop.permute.xlu0 %619
      %621 = vrot.lane.b32.xlu0 %v576, 24
      %v622 = vpop.permute.xlu0 %621
      %623 = vrot.lane.b32.xlu0 %v583, 24
      %v624 = vpop.permute.xlu0 %623
      %625 = vrot.lane.b32.xlu0 %v590, 24
      %v626 = vpop.permute.xlu0 %625
      %627 = vrot.lane.b32.xlu0 %v597, 24
      %v628 = vpop.permute.xlu0 %627
      %629 = vrot.lane.b32.xlu0 %v604, 24
      %v630 = vpop.permute.xlu0 %629
      %631 = vrot.lane.b32.xlu0 %v611, 24
      %v632 = vpop.permute.xlu0 %631
      %633 = vrot.lane.b32.xlu0 %v618, 24
      %v634 = vpop.permute.xlu0 %633
      %v643 = vunpack.c.l.b16 %v354
      %v644 = vunpack.c.l.b16 %v355
      %v645 = vunpack.c.l.b16 %v356
      %v646 = vunpack.c.l.b16 %v357
      %v647 = vunpack.c.l.b16 %v358
      %v648 = vunpack.c.l.b16 %v359
      %v649 = vunpack.c.l.b16 %v360
      %v650 = vunpack.c.l.b16 %v352
      %v651 = vpack.c.b16 %v643, %v643
      %v652 = vpack.c.b16 %v644, %v644
      %v653 = vpack.c.b16 %v645, %v645
      %v654 = vpack.c.b16 %v646, %v646
      %v655 = vpack.c.b16 %v647, %v647
      %v656 = vpack.c.b16 %v648, %v648
      %v657 = vpack.c.b16 %v649, %v649
      %v658 = vpack.c.b16 %v650, %v650
      %659 = vrot.lane.b32.xlu0 %v651, 32
      %v660 = vpop.permute.xlu0 %659
      %661 = vrot.lane.b32.xlu0 %v652, 32
      %v662 = vpop.permute.xlu0 %661
      %663 = vrot.lane.b32.xlu0 %v653, 32
      %v664 = vpop.permute.xlu0 %663
      %665 = vrot.lane.b32.xlu0 %v654, 32
      %v666 = vpop.permute.xlu0 %665
      %667 = vrot.lane.b32.xlu0 %v655, 32
      %v668 = vpop.permute.xlu0 %667
      %669 = vrot.lane.b32.xlu0 %v656, 32
      %v670 = vpop.permute.xlu0 %669
      %671 = vrot.lane.b32.xlu0 %v657, 32
      %v672 = vpop.permute.xlu0 %671
      %673 = vrot.lane.b32.xlu0 %v658, 32
      %v674 = vpop.permute.xlu0 %673
      %v683 = vunpack.c.l.b16 %v362
      %v684 = vunpack.c.l.b16 %v363
      %v685 = vunpack.c.l.b16 %v364
      %v686 = vunpack.c.l.b16 %v365
      %v687 = vunpack.c.l.b16 %v366
      %v688 = vunpack.c.l.b16 %v367
      %v689 = vunpack.c.l.b16 %v368
      %v690 = vunpack.c.l.b16 %v361
      %v691 = vpack.c.b16 %v683, %v643
      %v692 = vpack.c.b16 %v684, %v644
      %v693 = vpack.c.b16 %v685, %v645
      %v694 = vpack.c.b16 %v686, %v646
      %v695 = vpack.c.b16 %v687, %v647
      %v696 = vpack.c.b16 %v688, %v648
      %v697 = vpack.c.b16 %v689, %v649
      %v698 = vpack.c.b16 %v690, %v650
      %v700 = vshrl.u32 %v691, 16
      %v702 = vshll.u32 %v691, 16
      %v704 = vrot.slane %v702, 1
      %v705 = vor.u32 %v700, %v704
      %v707 = vshrl.u32 %v692, 16
      %v709 = vshll.u32 %v692, 16
      %v711 = vrot.slane %v709, 1
      %v712 = vor.u32 %v707, %v711
      %v714 = vshrl.u32 %v693, 16
      %v716 = vshll.u32 %v693, 16
      %v718 = vrot.slane %v716, 1
      %v719 = vor.u32 %v714, %v718
      %v721 = vshrl.u32 %v694, 16
      %v723 = vshll.u32 %v694, 16
      %v725 = vrot.slane %v723, 1
      %v726 = vor.u32 %v721, %v725
      %v728 = vshrl.u32 %v695, 16
      %v730 = vshll.u32 %v695, 16
      %v732 = vrot.slane %v730, 1
      %v733 = vor.u32 %v728, %v732
      %v735 = vshrl.u32 %v696, 16
      %v737 = vshll.u32 %v696, 16
      %v739 = vrot.slane %v737, 1
      %v740 = vor.u32 %v735, %v739
      %v742 = vshrl.u32 %v697, 16
      %v744 = vshll.u32 %v697, 16
      %v746 = vrot.slane %v744, 1
      %v747 = vor.u32 %v742, %v746
      %v749 = vshrl.u32 %v698, 16
      %v751 = vshll.u32 %v698, 16
      %v753 = vrot.slane %v751, 1
      %v754 = vor.u32 %v749, %v753
      %755 = vrot.lane.b32.xlu0 %v705, 40
      %v756 = vpop.permute.xlu0 %755
      %757 = vrot.lane.b32.xlu0 %v712, 40
      %v758 = vpop.permute.xlu0 %757
      %759 = vrot.lane.b32.xlu0 %v719, 40
      %v760 = vpop.permute.xlu0 %759
      %761 = vrot.lane.b32.xlu0 %v726, 40
      %v762 = vpop.permute.xlu0 %761
      %763 = vrot.lane.b32.xlu0 %v733, 40
      %v764 = vpop.permute.xlu0 %763
      %765 = vrot.lane.b32.xlu0 %v740, 40
      %v766 = vpop.permute.xlu0 %765
      %767 = vrot.lane.b32.xlu0 %v747, 40
      %v768 = vpop.permute.xlu0 %767
      %769 = vrot.lane.b32.xlu0 %v754, 40
      %v770 = vpop.permute.xlu0 %769
      %v779 = vunpack.c.l.b16 %v372
      %v780 = vunpack.c.l.b16 %v373
      %v781 = vunpack.c.l.b16 %v374
      %v782 = vunpack.c.l.b16 %v375
      %v783 = vunpack.c.l.b16 %v376
      %v784 = vunpack.c.l.b16 %v377
      %v785 = vunpack.c.l.b16 %v378
      %v786 = vunpack.c.l.b16 %v370
      %v787 = vpack.c.b16 %v779, %v779
      %v788 = vpack.c.b16 %v780, %v780
      %v789 = vpack.c.b16 %v781, %v781
      %v790 = vpack.c.b16 %v782, %v782
      %v791 = vpack.c.b16 %v783, %v783
      %v792 = vpack.c.b16 %v784, %v784
      %v793 = vpack.c.b16 %v785, %v785
      %v794 = vpack.c.b16 %v786, %v786
      %795 = vrot.lane.b32.xlu0 %v787, 48
      %v796 = vpop.permute.xlu0 %795
      %797 = vrot.lane.b32.xlu0 %v788, 48
      %v798 = vpop.permute.xlu0 %797
      %799 = vrot.lane.b32.xlu0 %v789, 48
      %v800 = vpop.permute.xlu0 %799
      %801 = vrot.lane.b32.xlu0 %v790, 48
      %v802 = vpop.permute.xlu0 %801
      %803 = vrot.lane.b32.xlu0 %v791, 48
      %v804 = vpop.permute.xlu0 %803
      %805 = vrot.lane.b32.xlu0 %v792, 48
      %v806 = vpop.permute.xlu0 %805
      %807 = vrot.lane.b32.xlu0 %v793, 48
      %v808 = vpop.permute.xlu0 %807
      %809 = vrot.lane.b32.xlu0 %v794, 48
      %v810 = vpop.permute.xlu0 %809
      %v819 = vunpack.c.l.b16 %v380
      %v820 = vunpack.c.l.b16 %v381
      %v821 = vunpack.c.l.b16 %v382
      %v822 = vunpack.c.l.b16 %v383
      %v823 = vunpack.c.l.b16 %v384
      %v824 = vunpack.c.l.b16 %v385
      %v825 = vunpack.c.l.b16 %v386
      %v826 = vunpack.c.l.b16 %v379
      %v827 = vpack.c.b16 %v819, %v779
      %v828 = vpack.c.b16 %v820, %v780
      %v829 = vpack.c.b16 %v821, %v781
      %v830 = vpack.c.b16 %v822, %v782
      %v831 = vpack.c.b16 %v823, %v783
      %v832 = vpack.c.b16 %v824, %v784
      %v833 = vpack.c.b16 %v825, %v785
      %v834 = vpack.c.b16 %v826, %v786
      %v836 = vshrl.u32 %v827, 16
      %v838 = vshll.u32 %v827, 16
      %v840 = vrot.slane %v838, 1
      %v841 = vor.u32 %v836, %v840
      %v843 = vshrl.u32 %v828, 16
      %v845 = vshll.u32 %v828, 16
      %v847 = vrot.slane %v845, 1
      %v848 = vor.u32 %v843, %v847
      %v850 = vshrl.u32 %v829, 16
      %v852 = vshll.u32 %v829, 16
      %v854 = vrot.slane %v852, 1
      %v855 = vor.u32 %v850, %v854
      %v857 = vshrl.u32 %v830, 16
      %v859 = vshll.u32 %v830, 16
      %v861 = vrot.slane %v859, 1
      %v862 = vor.u32 %v857, %v861
      %v864 = vshrl.u32 %v831, 16
      %v866 = vshll.u32 %v831, 16
      %v868 = vrot.slane %v866, 1
      %v869 = vor.u32 %v864, %v868
      %v871 = vshrl.u32 %v832, 16
      %v873 = vshll.u32 %v832, 16
      %v875 = vrot.slane %v873, 1
      %v876 = vor.u32 %v871, %v875
      %v878 = vshrl.u32 %v833, 16
      %v880 = vshll.u32 %v833, 16
      %v882 = vrot.slane %v880, 1
      %v883 = vor.u32 %v878, %v882
      %v885 = vshrl.u32 %v834, 16
      %v887 = vshll.u32 %v834, 16
      %v889 = vrot.slane %v887, 1
      %v890 = vor.u32 %v885, %v889
      %891 = vrot.lane.b32.xlu0 %v841, 56
      %v892 = vpop.permute.xlu0 %891
      %893 = vrot.lane.b32.xlu0 %v848, 56
      %v894 = vpop.permute.xlu0 %893
      %895 = vrot.lane.b32.xlu0 %v855, 56
      %v896 = vpop.permute.xlu0 %895
      %897 = vrot.lane.b32.xlu0 %v862, 56
      %v898 = vpop.permute.xlu0 %897
      %899 = vrot.lane.b32.xlu0 %v869, 56
      %v900 = vpop.permute.xlu0 %899
      %901 = vrot.lane.b32.xlu0 %v876, 56
      %v902 = vpop.permute.xlu0 %901
      %903 = vrot.lane.b32.xlu0 %v883, 56
      %v904 = vpop.permute.xlu0 %903
      %905 = vrot.lane.b32.xlu0 %v890, 56
      %v906 = vpop.permute.xlu0 %905
      %vm907 = vcmask 64512
      %v910 = vsel %vm907, %v319, %v484
      %v913 = vsel %vm907, %v320, %v486
      %v916 = vsel %vm907, %v321, %v488
      %v919 = vsel %vm907, %v322, %v490
      %v922 = vsel %vm907, %v323, %v492
      %v925 = vsel %vm907, %v324, %v494
      %v928 = vsel %vm907, %v325, %v496
      %v931 = vsel %vm907, %v326, %v498
      %vm932 = vcmask 130048
      %v934 = vsel %vm932, %v910, %v524
      %v936 = vsel %vm932, %v913, %v526
      %v938 = vsel %vm932, %v916, %v528
      %v940 = vsel %vm932, %v919, %v530
      %v942 = vsel %vm932, %v922, %v532
      %v944 = vsel %vm932, %v925, %v534
      %v946 = vsel %vm932, %v928, %v536
      %v948 = vsel %vm932, %v931, %v538
      %vm949 = vcmask 195584
      %v951 = vsel %vm949, %v934, %v620
      %v953 = vsel %vm949, %v936, %v622
      %v955 = vsel %vm949, %v938, %v624
      %v957 = vsel %vm949, %v940, %v626
      %v959 = vsel %vm949, %v942, %v628
      %v961 = vsel %vm949, %v944, %v630
      %v963 = vsel %vm949, %v946, %v632
      %v965 = vsel %vm949, %v948, %v634
      %vm966 = vcmask 261120
      %v968 = vsel %vm966, %v951, %v660
      %v970 = vsel %vm966, %v953, %v662
      %v972 = vsel %vm966, %v955, %v664
      %v974 = vsel %vm966, %v957, %v666
      %v976 = vsel %vm966, %v959, %v668
      %v978 = vsel %vm966, %v961, %v670
      %v980 = vsel %vm966, %v963, %v672
      %v982 = vsel %vm966, %v965, %v674
      %vm983 = vcmask 326656
      %v985 = vsel %vm983, %v968, %v756
      %v987 = vsel %vm983, %v970, %v758
      %v989 = vsel %vm983, %v972, %v760
      %v991 = vsel %vm983, %v974, %v762
      %v993 = vsel %vm983, %v976, %v764
      %v995 = vsel %vm983, %v978, %v766
      %v997 = vsel %vm983, %v980, %v768
      %v999 = vsel %vm983, %v982, %v770
      %vm1000 = vcmask 392192
      %v1002 = vsel %vm1000, %v985, %v796
      %v1004 = vsel %vm1000, %v987, %v798
      %v1006 = vsel %vm1000, %v989, %v800
      %v1008 = vsel %vm1000, %v991, %v802
      %v1010 = vsel %vm1000, %v993, %v804
      %v1012 = vsel %vm1000, %v995, %v806
      %v1014 = vsel %vm1000, %v997, %v808
      %v1016 = vsel %vm1000, %v999, %v810
      %vm1017 = vcmask 457728
      %v1019 = vsel %vm1017, %v1002, %v892
      %v1021 = vsel %vm1017, %v1004, %v894
      %v1023 = vsel %vm1017, %v1006, %v896
      %v1025 = vsel %vm1017, %v1008, %v898
      %v1027 = vsel %vm1017, %v1010, %v900
      %v1029 = vsel %vm1017, %v1012, %v902
      %v1031 = vsel %vm1017, %v1014, %v904
      %v1033 = vsel %vm1017, %v1016, %v906
      %v1034 = vld [vmem:[%s2] sm:$0xf]
      %v1035 = vld [vmem:[%s2 + $0x4] sm:$0xf]
      %v1036 = vld [vmem:[%s2 + $0x8] sm:$0xf]
      %v1037 = vld [vmem:[%s2 + $0xc] sm:$0xf]
      %v1038 = vld [vmem:[%s2 + $0x10] sm:$0xf]
      %v1039 = vld [vmem:[%s2 + $0x14] sm:$0xf]
      %v1040 = vld [vmem:[%s2 + $0x18] sm:$0xf]
      %v1041 = vld [vmem:[%s2 + $0x1c] sm:$0xf]
      %v1042 = vld [vmem:[%s3] sm:$0x1]
      %v1044 = vlaneseq
      %v1045 = vshrl.u32 %v1044, 7
      %v1046 = vsub.s32 0, %v1045
      %v1047 = vrot.slane %v1042, %v1046
      %v1057 = vunpack.c.l.b16 %v1019
      %v1058 = vunpack.c.l.b16 %v1021
      %v1059 = vunpack.c.l.b16 %v1023
      %v1060 = vunpack.c.l.b16 %v1025
      %v1061 = vunpack.c.l.b16 %v1027
      %v1062 = vunpack.c.l.b16 %v1029
      %v1063 = vunpack.c.l.b16 %v1031
      %v1064 = vunpack.c.l.b16 %v1033
      %v1065 = vpack.c.b16 %v1058, %v1057
      %v1066 = vpack.c.b16 %v1060, %v1059
      %v1067 = vpack.c.b16 %v1062, %v1061
      %v1068 = vpack.c.b16 %v1064, %v1063
      %v1077 = vunpack.c.l.b16 %v1034
      %v1078 = vunpack.c.l.b16 %v1035
      %v1079 = vunpack.c.l.b16 %v1036
      %v1080 = vunpack.c.l.b16 %v1037
      %v1081 = vunpack.c.l.b16 %v1038
      %v1082 = vunpack.c.l.b16 %v1039
      %v1083 = vunpack.c.l.b16 %v1040
      %v1084 = vunpack.c.l.b16 %v1041
      %v1085 = vpack.c.b16 %v1078, %v1077
      %v1086 = vpack.c.b16 %v1080, %v1079
      %v1087 = vpack.c.b16 %v1082, %v1081
      %v1088 = vpack.c.b16 %v1084, %v1083
      %vm1093 = vcmask 523264
      %v1095 = vsel %vm1093, %v1065, 0
      %v1098 = vsel %vm1093, %v1066, 0
      %v1101 = vsel %vm1093, %v1067, 0
      %v1104 = vsel %vm1093, %v1068, 0
      %1106 = vmatprep.subr.bf16.mxu0 0
      %1107 = vmatpush1.bf16.msra.mxu0 %v1085
      %1108 = vmatprep.subr.bf16.mxu0 0
      %1109 = vmatpush1.bf16.msra.mxu0 %v1086
      %1110 = vmatprep.subr.bf16.mxu0 0
      %1111 = vmatpush1.bf16.msra.mxu0 %v1087
      %1112 = vmatprep.subr.bf16.mxu0 0
      %1113 = vmatpush1.bf16.msra.mxu0 %v1088
      %1114 = vmatprep.subr.bf16.mxu0 0
      %1115 = vmatpush1.bf16.msra.mxu0 0
      %1116 = vmatprep.subr.bf16.mxu0 0
      %1117 = vmatpush1.bf16.msra.mxu0 0
      %1118 = vmatprep.subr.bf16.mxu0 0
      %1119 = vmatpush1.bf16.msra.mxu0 0
      %1120 = vmatprep.subr.bf16.mxu0 0
      %1121 = vmatpush1.bf16.msra.mxu0 0
      %1122 = vmatprep.subr.bf16.mxu0 0
      %1123 = vmatpush1.bf16.msra.mxu0 0
      %1124 = vmatprep.subr.bf16.mxu0 0
      %1125 = vmatpush1.bf16.msra.mxu0 0
      %1126 = vmatprep.subr.bf16.mxu0 0
      %1127 = vmatpush1.bf16.msra.mxu0 0
      %1128 = vmatprep.subr.bf16.mxu0 0
      %1129 = vmatpush1.bf16.msra.mxu0 0
      %1130 = vmatprep.subr.bf16.mxu0 0
      %1131 = vmatpush1.bf16.msra.mxu0 0
      %1132 = vmatprep.subr.bf16.mxu0 0
      %1133 = vmatpush1.bf16.msra.mxu0 0
      %1134 = vmatprep.subr.bf16.mxu0 0
      %1135 = vmatpush1.bf16.msra.mxu0 0
      %1136 = vmatprep.subr.bf16.mxu0 0
      %1137 = vmatpush1.bf16.msra.mxu0 0
      %1138 = vmatprep.mubr.bf16.mxu0 0
      %1139 = vmatmul.mubr.bf16.gmra.mrb[0].mxu0 %v1095
      %v1140 = vpop.f32.mrb[0].mxu0
      %v1141 = vadd.f32 %v1047, %v1140
      %v1142 = vpop.f32.mrb[0].mxu0
      %v1143 = vpop.f32.mrb[0].mxu0
      %v1144 = vadd.f32 %v1047, %v1143
      %v1145 = vpop.f32.mrb[0].mxu0
      %1146 = vmatprep.mubr.bf16.mxu0 0
      %1147 = vmatmul.mubr.bf16.gmra.mrb[0].mxu0 %v1098
      %v1148 = vpop.f32.mrb[0].mxu0
      %v1149 = vadd.f32 %v1047, %v1148
      %v1150 = vpop.f32.mrb[0].mxu0
      %v1151 = vpop.f32.mrb[0].mxu0
      %v1152 = vadd.f32 %v1047, %v1151
      %v1153 = vpop.f32.mrb[0].mxu0
      %1154 = vmatprep.mubr.bf16.mxu0 0
      %1155 = vmatmul.mubr.bf16.gmra.mrb[0].mxu0 %v1101
      %v1156 = vpop.f32.mrb[0].mxu0
      %v1157 = vadd.f32 %v1047, %v1156
      %v1158 = vpop.f32.mrb[0].mxu0
      %v1159 = vpop.f32.mrb[0].mxu0
      %v1160 = vadd.f32 %v1047, %v1159
      %v1161 = vpop.f32.mrb[0].mxu0
      %1162 = vmatprep.mubr.bf16.mxu0 0
      %1163 = vmatmul.mubr.bf16.gmra.mrb[0].mxu0 %v1104
      %v1164 = vpop.f32.mrb[0].mxu0
      %v1165 = vadd.f32 %v1047, %v1164
      %v1166 = vpop.f32.mrb[0].mxu0
      %v1167 = vpop.f32.mrb[0].mxu0
      %v1168 = vadd.f32 %v1047, %v1167
      %v1169 = vpop.f32.mrb[0].mxu0
      %1170 = vdwg.mxu0
      %1171 = vst.msk [vmem:[%s316] sm:$0xff] %vm907, %v1141
      %1172 = vst.msk [vmem:[%s316 + $0x8] sm:$0xff] %vm907, %v1144
      %1173 = vst.msk [vmem:[%s316 + $0x10] sm:$0xff] %vm907, %v1149
      %1174 = vst.msk [vmem:[%s316 + $0x18] sm:$0xff] %vm907, %v1152
      %1175 = vst.msk [vmem:[%s316 + $0x20] sm:$0xff] %vm907, %v1157
      %1176 = vst.msk [vmem:[%s316 + $0x28] sm:$0xff] %vm907, %v1160
      %1177 = vst.msk [vmem:[%s316 + $0x30] sm:$0xff] %vm907, %v1165
      %1178 = vst.msk [vmem:[%s316 + $0x38] sm:$0xff] %vm907, %v1168
      %s1179 = smul.u32 8, %s20
      %p1180 = scmp.lt.s32.totalorder %s19, 1
      %s1181 = scalar_select %p1180, %s19, 1
      %p1182 = scmp.lt.s32.totalorder %s1179, 7
      %s1183 = scalar_select %p1182, %s1179, 7
      %s1184 = smul.addr %s1181, 8
      %s1185 = sadd.s32 %s1183, %s1184
      %s1186 = smul.addr %s1185, 8
      %s1187 = scalar_lea.vmem %s4, %s1186
      // Predicated region
      $region37: #{downsampler_forward.1} parent=35 // pred_check
        %p1188 = pneg %p149
      $region38: #{downsampler_forward.1} parent=35 // pred_check_branch
        %1190 = sbr.rel (%p1188) target = $region40
      $region39: #{downsampler_forward.1} parent=35 // pred_region
        %s1191 = smul.u32 8, %s20
      $region40: #{downsampler_forward.1} parent=35 // pred_fallthru
        _
    $region36: #{downsampler_forward.1} parent=5 // pred_fallthru
      _
    %p1192 = scmp.le.s32.totalorder 2, %s10
    // Predicated region
    $region41: #{downsampler_forward.1} parent=5 // pred_check
      %p1193 = pneg %p1192
    $region42: #{downsampler_forward.1} parent=5 // pred_check_branch
      %1195 = sbr.rel (%p1193) target = $region44
    $region43: #{downsampler_forward.1} parent=5 // pred_region
      %s1196 = ssub.s32 %s10, 2
      // Predicated region
      $region45: #{downsampler_forward.1} parent=43 // pred_check
        %p1197 = pneg %p155
      $region46: #{downsampler_forward.1} parent=43 // pred_check_branch
        %1199 = sbr.rel (%p1197) target = $region48
      $region47: #{downsampler_forward.1} parent=43 // pred_region
        %s1200 = smul.u32 8, %s22
        %p1201 = scmp.lt.s32.totalorder %s21, 1
        %s1202 = scalar_select %p1201, %s21, 1
        %p1203 = scmp.lt.s32.totalorder %s1200, 7
        %s1204 = scalar_select %p1203, %s1200, 7
        %s1205 = smul.addr %s1202, 8
        %s1206 = sadd.s32 %s1204, %s1205
        %s1207 = smul.addr %s1206, 8
        %s1208 = scalar_lea.vmem %s4, %s1207
      $region48: #{downsampler_forward.1} parent=43 // pred_fallthru
        _
    $region44: #{downsampler_forward.1} parent=5 // pred_fallthru
      _
  $region6: #{downsampler_forward.1} parent=0 // loop_footer
    %s14 = sadd.s32 1, %s10
  $region7: #{downsampler_forward.1} parent=0 // loop_footer_branch
    %9 = sbr.rel target = $region3
  $region8: #{downsampler_forward.1} parent=0 // loop_exit
    _

</llo_original>
